<compile_context>
chip_gen: v7x
topology: tpu7x:2x2x1
jax: 0.10.0
libtpu: 0.0.40
codegen_flags: <defaults>
</compile_context>

<pallas_src>
import jax
import jax.numpy as jnp
from jax import lax
from jax.experimental import pallas as pl
from jax.experimental.pallas import tpu as pltpu


def _round_up(x, m):
    return (x + m - 1) // m * m


def _conv_gemm_kernel(w_ref, p_ref, b_ref, o_ref):
    # w_ref: (N_pad, K)  bf16 weight, resident in VMEM across the whole grid
    # p_ref: (K, tm)     bf16 im2col tile (tm % 128 == 0 -> lane-dense loads/stores)
    # b_ref: (N_pad, 1)  f32 bias, resident
    # o_ref: (N_pad, tm) output tile -> lane-dense, unmasked vst
    acc = jnp.dot(w_ref[...], p_ref[...], preferred_element_type=jnp.float32)
    o_ref[...] = (acc + b_ref[...]).astype(o_ref.dtype)


def _extract_patches(x, KH, KW, stride, padding):
    """im2col -> (B, K, OH*OW) with K flattened in (c, kh, kw) order (== weight order)."""
    B, C, H, W = x.shape
    OH = (H + 2 * padding - KH) // stride + 1
    OW = (W + 2 * padding - KW) // stride + 1
    if stride == KH and stride == KW and padding == 0 and H % KH == 0 and W % KW == 0:
        # Non-overlapping patch embedding: pure reshape/transpose, no data duplication.
        p = x.reshape(B, C, OH, KH, OW, KW).transpose(0, 1, 3, 5, 2, 4)
        return p.reshape(B, C * KH * KW, OH * OW), OH, OW
    # Overlapping patches: XLA builds them directly in (B, K, OH, OW) layout; the K
    # (channel) order is "c" + "HW" == (c, kh, kw), matching weight.reshape(C_out, K).
    p = lax.conv_general_dilated_patches(
        x, (KH, KW), (stride, stride),
        padding=[(padding, padding), (padding, padding)],
        dimension_numbers=("NCHW", "OIHW", "NCHW"))
    return p.reshape(B, C * KH * KW, OH * OW), OH, OW


def conv_embedding_forward(x, weight, bias, stride, padding, *, tm=None):
    """Equivalent of PyTorch nn.Conv2d(C_in, C_out, patch, stride, padding, bias=True)(x)."""
    B, C, H, W = x.shape
    C_out, C_in, KH, KW = weight.shape
    assert C == C_in
    out_dtype = x.dtype
    compute_dtype = jnp.bfloat16  # full-rate MXU operands; accumulation stays f32

    patches, OH, OW = _extract_patches(x.astype(compute_dtype), KH, KW, stride, padding)
    K = C * KH * KW
    L = OH * OW

    # Spatial (lane) tile: multiple of 128, capped so double-buffered tiles + resident
    # weight fit comfortably in VMEM on every generation (v7x: 64 MiB physical).
    if tm is None:
        tm = min(1024, _round_up(L, 128))
    tm = max(128, _round_up(tm, 128))
    L_pad = _round_up(L, tm)
    n_l = L_pad // tm
    if L_pad != L:
        patches = jnp.pad(patches, ((0, 0), (0, 0), (0, L_pad - L)))

    # Weight (C_out, C_in, KH, KW) -> (N_pad, K); same (c, kh, kw) flattening as patches.
    N_pad = _round_up(C_out, 8)
    w2d = weight.reshape(C_out, K).astype(compute_dtype)
    b2d = bias.astype(jnp.float32).reshape(C_out, 1)
    if N_pad != C_out:
        w2d = jnp.pad(w2d, ((0, N_pad - C_out), (0, 0)))
        b2d = jnp.pad(b2d, ((0, N_pad - C_out), (0, 0)))

    out = pl.pallas_call(
        _conv_gemm_kernel,
        out_shape=jax.ShapeDtypeStruct((B, N_pad, L_pad), out_dtype),
        grid=(B, n_l),
        in_specs=[
            pl.BlockSpec((N_pad, K), lambda b, j: (0, 0)),        # weight: resident
            pl.BlockSpec((None, K, tm), lambda b, j: (b, 0, j)),  # patches tile (bf16)
            pl.BlockSpec((N_pad, 1), lambda b, j: (0, 0)),        # bias: resident
        ],
        out_specs=pl.BlockSpec((None, N_pad, tm), lambda b, j: (b, 0, j)),
        compiler_params=pltpu.CompilerParams(
            dimension_semantics=("parallel", "parallel"),
            vmem_limit_bytes=48 * 1024 * 1024),
    )(w2d, patches, b2d)

    if N_pad != C_out or L_pad != L:
        out = out[:, :C_out, :L]
    return out.reshape(B, C_out, OH, OW)  # already NCHW: no final transpose needed


if __name__ == "__main__":
    # Small shapes consistent with the module: conv_embedding(4, 32, patch_size=4, ...)
    B, C_in, H, W = 2, 4, 16, 16
    C_out, patch_size = 32, 4

    key = jax.random.PRNGKey(0)
    kx, kw, kb = jax.random.split(key, 3)
    x = jax.random.normal(kx, (B, C_in, H, W), dtype=jnp.float32)
    weight = jax.random.normal(kw, (C_out, C_in, patch_size, patch_size), dtype=jnp.float32) * 0.05
    bias = jax.random.normal(kb, (C_out,), dtype=jnp.float32) * 0.05

    # Exercise both patch-extraction paths: overlapping (stride<patch) and non-overlapping.
    for stride, padding in [(2, 1), (4, 0)]:
        out = conv_embedding_forward(x, weight, bias, stride, padding)
        out = jax.block_until_ready(out)

        ref = lax.conv_general_dilated(
            x, weight,
            window_strides=(stride, stride),
            padding=[(padding, padding), (padding, padding)],
            dimension_numbers=("NCHW", "OIHW", "NCHW"),
        ) + bias.reshape(1, C_out, 1, 1)

        assert out.shape == ref.shape, (out.shape, ref.shape)
        # bf16 operands with f32 accumulation -> loosened tolerance vs the f32 reference.
        err = float(jnp.abs(out - ref).max())
        assert jnp.allclose(out, ref, atol=5e-2, rtol=5e-2), err

    print("KERNEL_OK")
</pallas_src>

<mosaic_0001>
module attributes {stable_mosaic.version = 11 : i64} {
  func.func @_conv_gemm_kernel(%arg0: i32, %arg1: i32, %arg2: memref<32x64xbf16, #tpu.memory_space<vmem>>, %arg3: memref<1x64x128xbf16, #tpu.memory_space<vmem>>, %arg4: memref<32x1xf32, #tpu.memory_space<vmem>>, %arg5: memref<1x32x128xf32, #tpu.memory_space<vmem>>) attributes {dimension_semantics = [#tpu.dimension_semantics<parallel>, #tpu.dimension_semantics<parallel>], iteration_bounds = array<i64: 2, 1>, scalar_prefetch = 0 : i64, scratch_operands = 0 : i64, tpu.core_type = #tpu.core_type<tc>, window_params = [{pipeline_mode = #tpu.pipeline_mode<synchronous>, transform_indices = @transform_0, window_bounds = array<i64: 32, 64>}, {transform_indices = @transform_1, window_bounds = array<i64: 1, 64, 128>}, {pipeline_mode = #tpu.pipeline_mode<synchronous>, transform_indices = @transform_2, window_bounds = array<i64: 32, 1>}, {transform_indices = @transform_3, window_bounds = array<i64: 1, 32, 128>}]} {
    %c0 = arith.constant 0 : index
    %c0_0 = arith.constant 0 : index
    %0 = vector.load %arg2[%c0, %c0_0] : memref<32x64xbf16, #tpu.memory_space<vmem>>, vector<32x64xbf16>
    %c0_1 = arith.constant 0 : index
    %c0_2 = arith.constant 0 : index
    %c0_3 = arith.constant 0 : index
    %1 = vector.load %arg3[%c0_1, %c0_2, %c0_3] : memref<1x64x128xbf16, #tpu.memory_space<vmem>>, vector<1x64x128xbf16>
    %2 = vector.shape_cast %1 : vector<1x64x128xbf16> to vector<64x128xbf16>
    %cst = arith.constant dense<0.000000e+00> : vector<32x128xf32>
    %3 = tpu.matmul %0, %2, %cst {dimension_numbers = #tpu.dot_dimension_numbers<[1], [0], [0], [1], [0, 0, 1, 1], [], []>} : vector<32x64xbf16>, vector<64x128xbf16>, vector<32x128xf32> -> vector<32x128xf32>
    %c0_4 = arith.constant 0 : index
    %c0_5 = arith.constant 0 : index
    %4 = vector.load %arg4[%c0_4, %c0_5] : memref<32x1xf32, #tpu.memory_space<vmem>>, vector<32x1xf32>
    %5 = vector.broadcast %4 : vector<32x1xf32> to vector<32x128xf32>
    %6 = arith.addf %3, %5 : vector<32x128xf32>
    %c0_6 = arith.constant 0 : index
    %c0_7 = arith.constant 0 : index
    %c0_8 = arith.constant 0 : index
    %7 = vector.load %arg5[%c0_6, %c0_7, %c0_8] : memref<1x32x128xf32, #tpu.memory_space<vmem>>, vector<1x32x128xf32>
    %8 = vector.shape_cast %7 : vector<1x32x128xf32> to vector<32x128xf32>
    %9 = vector.shape_cast %6 : vector<32x128xf32> to vector<1x32x128xf32>
    tpu.vector_store %arg5[%c0_6, %c0_7, %c0_8], %9 {strides = array<i32>} : memref<1x32x128xf32, #tpu.memory_space<vmem>>, vector<1x32x128xf32>,
    return
  }
  func.func @transform_0(%arg0: i32, %arg1: i32) -> (i32, i32) {
    %c0_i32 = arith.constant 0 : i32
    %c0_i32_0 = arith.constant 0 : i32
    %c0_i32_1 = arith.constant 0 : i32
    return %c0_i32, %c0_i32_0 : i32, i32
  }
  func.func @transform_1(%arg0: i32, %arg1: i32) -> (i32, i32, i32) {
    %c0_i32 = arith.constant 0 : i32
    %c0_i32_0 = arith.constant 0 : i32
    return %arg0, %c0_i32, %arg1 : i32, i32, i32
  }
  func.func @transform_2(%arg0: i32, %arg1: i32) -> (i32, i32) {
    %c0_i32 = arith.constant 0 : i32
    %c0_i32_0 = arith.constant 0 : i32
    %c0_i32_1 = arith.constant 0 : i32
    return %c0_i32, %c0_i32_0 : i32, i32
  }
  func.func @transform_3(%arg0: i32, %arg1: i32) -> (i32, i32, i32) {
    %c0_i32 = arith.constant 0 : i32
    %c0_i32_0 = arith.constant 0 : i32
    return %arg0, %c0_i32, %arg1 : i32, i32, i32
  }
}

</mosaic_0001>

<llo_original>
// kernel: tpu_custom_call.1
$region0: #{tpu_custom_call.1}
  #allocation0 [shape = 'u32[]', space=smem, size = 0x4, offset = 0x4, fixed_abs, tag = 'smem constant byte address 0x4 - core index']
  #allocation1 [shape = 'u32[144,128]{1,0:T(1,128)}', space=vmem, size = 0x12000, scoped, tag = 'internal scratch']
  %s0 = inlined_call_operand.vmem [shape: bf16[32,64], index: 0, kind: input, shape index: {}]
  %s1 = inlined_call_operand.hbm [shape: bf16[2,64,128], index: 1, kind: input, shape index: {}]
  %s2 = inlined_call_operand.vmem [shape: f32[32,1], index: 2, kind: input, shape index: {}]
  %s3 = inlined_call_operand.hbm [shape: f32[2,32,128], index: 3, kind: output, shape index: {}]
  %s4 = sld [smem:[#allocation0]]
  $region49: #{tpu_custom_call.1} parent=0
    _
  %s6 = ssub.s32 1, %s4
  %s7 = scalar_select 0, %s6, %s4
  $region1: #{tpu_custom_call.1} parent=0
    #allocation2 [shape = 'u8[32768]{0}', space=vmem, size = 0x8000, scoped, tag = 'input window, operand 1']
    #allocation3 [shape = 's32[2]{0}', space=sflag, size = 0x8, scoped, tag = 'scoped memory for tpu_custom_call.1']
    #allocation4 [shape = 's32[2]{0}', space=sflag, size = 0x8, scoped, tag = 'scoped memory for tpu_custom_call.1']
    #allocation5 [shape = 'u8[32768]{0}', space=vmem, size = 0x8000, scoped, tag = 'output window, operand 0']
    %8 = vsyncpa [#allocation3], 0
    %s9 = scalar_lea.sflag [#allocation3], 1
    %10 = vsyncpa %s9, 0
    %11 = vsyncpa [#allocation4], 0
    %s12 = scalar_lea.sflag [#allocation4], 1
    %13 = vsyncpa %s12, 0
    loop: start=0, step=1, limit=4
    $region2: #{tpu_custom_call.1} parent=1 // loop_pre_header
      _
    $region3: #{tpu_custom_call.1} parent=1 // loop_header
      %s15 = sphi 0, %s19
      %p16 = scmp.ge.s32.totalorder %s15, 4
      %s22 = sphi 0, %s34
      %s23 = sphi 0, %s30
      %s24 = sphi 0, %s22
      %s25 = sphi 0, %s23
      %s26 = sphi 0, %s24
      %s27 = sphi 0, %s25
      %s35 = sphi 0, %s35
      %s37 = sphi 0, %s35
      %s38 = sphi 0, %s37
      %s52 = sphi 0, %s38
      %s60 = sphi 0, %s62
      %s63 = sphi 0, %s60
      %s64 = sphi 0, %s63
      %s80 = sphi 0, %s64
      %s84 = sphi 0, %s84
      %s86 = sphi 0, %s84
      %s87 = sphi 0, %s86
      %s101 = sphi 0, %s87
      %s109 = sphi 0, %s111
      %s112 = sphi 0, %s109
      %s113 = sphi 0, %s112
      %s129 = sphi 0, %s113
    $region4: #{tpu_custom_call.1} parent=1 // loop_header_branch
      %18 = sbr.rel (%p16) target = $region8
    $region5: #{tpu_custom_call.1} parent=1 // loop_body
      %s20 = ssub.s32 %s15, 1
      %s21 = ssub.s32 %s15, 2
      %s28 = sadd.s32 1, %s23
      %p29 = scmp.ge.s32.totalorder %s28, 1
      %s30 = scalar_select %p29, 0, %s28
      %s31 = sadd.s32 1, %s22
      %s32 = scalar_select %p29, %s31, %s22
      %p33 = scmp.ge.s32.totalorder %s32, 2
      %s34 = scalar_select %p33, 0, %s32
      %s36 = sadd.s32 %s35, 1
      %p39 = scmp.eq.s32.totalorder %s15, 1
      %p40 = scmp.ne.s32.totalorder %s35, %s37
      %p41 = scmp.eq.s32.totalorder %s15, 0
      %p42 = por %p40, %p41
      %p43 = scmp.ne.s32.totalorder %s35, %s37
      %p44 = scmp.eq.s32.totalorder %s20, 1
      %p45 = por %p43, %p44
      %p46 = scmp.ne.s32.totalorder %s37, %s38
      %p47 = scmp.eq.s32.totalorder %s20, 0
      %p48 = por %p46, %p47
      %p49 = scmp.ne.s32.totalorder %s37, %s38
      %p50 = scmp.eq.s32.totalorder %s21, 1
      %p51 = por %p49, %p50
      %p53 = scmp.ne.s32.totalorder %s38, %s52
      %p54 = scmp.eq.s32.totalorder %s21, 0
      %p55 = por %p53, %p54
      %s56 = ssub.s32 %s22, %s34
      %s57 = ssub.s32 %s23, %s30
      %s58 = sor.u32 %s56, %s57
      %p59 = scmp.eq.s32.totalorder %s58, 0
      %s61 = sadd.s32 %s60, 1
      %s62 = scalar_select %p59, %s60, %s61
      %p65 = pneg %p59
      %p66 = scmp.eq.s32.totalorder %s15, 1
      %p67 = por %p65, %p66
      %p68 = scmp.ne.s32.totalorder %s60, %s63
      %p69 = scmp.eq.s32.totalorder %s15, 0
      %p70 = por %p68, %p69
      %p71 = scmp.ne.s32.totalorder %s60, %s63
      %p72 = scmp.eq.s32.totalorder %s20, 1
      %p73 = por %p71, %p72
      %p74 = scmp.ne.s32.totalorder %s63, %s64
      %p75 = scmp.eq.s32.totalorder %s20, 0
      %p76 = por %p74, %p75
      %p77 = scmp.ne.s32.totalorder %s63, %s64
      %p78 = scmp.eq.s32.totalorder %s21, 1
      %p79 = por %p77, %p78
      %p81 = scmp.ne.s32.totalorder %s64, %s80
      %p82 = scmp.eq.s32.totalorder %s21, 0
      %p83 = por %p81, %p82
      %s85 = sadd.s32 %s84, 1
      %p88 = scmp.eq.s32.totalorder %s15, 1
      %p89 = scmp.ne.s32.totalorder %s84, %s86
      %p90 = scmp.eq.s32.totalorder %s15, 0
      %p91 = por %p89, %p90
      %p92 = scmp.ne.s32.totalorder %s84, %s86
      %p93 = scmp.eq.s32.totalorder %s20, 1
      %p94 = por %p92, %p93
      %p95 = scmp.ne.s32.totalorder %s86, %s87
      %p96 = scmp.eq.s32.totalorder %s20, 0
      %p97 = por %p95, %p96
      %p98 = scmp.ne.s32.totalorder %s86, %s87
      %p99 = scmp.eq.s32.totalorder %s21, 1
      %p100 = por %p98, %p99
      %p102 = scmp.ne.s32.totalorder %s87, %s101
      %p103 = scmp.eq.s32.totalorder %s21, 0
      %p104 = por %p102, %p103
      %s105 = ssub.s32 %s22, %s34
      %s106 = ssub.s32 %s23, %s30
      %s107 = sor.u32 %s105, %s106
      %p108 = scmp.eq.s32.totalorder %s107, 0
      %s110 = sadd.s32 %s109, 1
      %s111 = scalar_select %p108, %s109, %s110
      %p114 = pneg %p108
      %p115 = scmp.eq.s32.totalorder %s15, 1
      %p116 = por %p114, %p115
      %p117 = scmp.ne.s32.totalorder %s109, %s112
      %p118 = scmp.eq.s32.totalorder %s15, 0
      %p119 = por %p117, %p118
      %p120 = scmp.ne.s32.totalorder %s109, %s112
      %p121 = scmp.eq.s32.totalorder %s20, 1
      %p122 = por %p120, %p121
      %p123 = scmp.ne.s32.totalorder %s112, %s113
      %p124 = scmp.eq.s32.totalorder %s20, 0
      %p125 = por %p123, %p124
      %p126 = scmp.ne.s32.totalorder %s112, %s113
      %p127 = scmp.eq.s32.totalorder %s21, 1
      %p128 = por %p126, %p127
      %p130 = scmp.ne.s32.totalorder %s113, %s129
      %p131 = scmp.eq.s32.totalorder %s21, 0
      %p132 = por %p130, %p131
      %p133 = scmp.le.s32.totalorder 1, %s15
      %p134 = scmp.lt.s32.totalorder %s15, 3
      %p135 = pnand %p133, %p134
      %p136 = pneg %p135
      // Predicated region
      $region9: #{tpu_custom_call.1} parent=5 // pred_check
        _
      $region10: #{tpu_custom_call.1} parent=5 // pred_check_branch
        %138 = sbr.rel (%p135) target = $region12
      $region11: #{tpu_custom_call.1} parent=5 // pred_region
        %s139 = ssub.s32 %s15, 1
        // Predicated region
        $region13: #{tpu_custom_call.1} parent=11 // pred_check
          %p140 = pneg %p48
        $region14: #{tpu_custom_call.1} parent=11 // pred_check_branch
          %142 = sbr.rel (%p140) target = $region16
        $region15: #{tpu_custom_call.1} parent=11 // pred_region
          _
        $region16: #{tpu_custom_call.1} parent=11 // pred_fallthru
          _
        // Predicated region
        $region17: #{tpu_custom_call.1} parent=11 // pred_check
          %p143 = pneg %p97
        $region18: #{tpu_custom_call.1} parent=11 // pred_check_branch
          %145 = sbr.rel (%p143) target = $region20
        $region19: #{tpu_custom_call.1} parent=11 // pred_region
          _
        $region20: #{tpu_custom_call.1} parent=11 // pred_fallthru
          _
      $region12: #{tpu_custom_call.1} parent=5 // pred_fallthru
        _
      %p146 = scmp.lt.s32.totalorder %s15, 2
      // Predicated region
      $region21: #{tpu_custom_call.1} parent=5 // pred_check
        %p147 = pneg %p146
      $region22: #{tpu_custom_call.1} parent=5 // pred_check_branch
        %149 = sbr.rel (%p147) target = $region24
      $region23: #{tpu_custom_call.1} parent=5 // pred_region
        // Predicated region
        $region25: #{tpu_custom_call.1} parent=23 // pred_check
          %p150 = pneg %p70
        $region26: #{tpu_custom_call.1} parent=23 // pred_check_branch
          %152 = sbr.rel (%p150) target = $region28
        $region27: #{tpu_custom_call.1} parent=23 // pred_region
          %s153 = sand.u32 %s60, 1
          %s154 = scalar_lea.sflag [#allocation3], %s153
          %s155 = sand.u32 %s60, 1
          %s156 = smul.addr %s155, 32
          %s157 = scalar_lea.vmem [#allocation2], %s156
          %s159 = ssub.s32 512, 512
          %160 = vsyncadd %s154, %s159
          %s161 = smul.addr %s22, 8
          %s162 = sadd.s32 %s23, %s161
          %s163 = smul.addr %s162, 64
          %s164 = scalar_lea.hbm %s1, %s163
          %s165 = sshll.u32 %s157, 4
          %s166 = int_to_ptr.vmem [resolvable:$true] %s165
          %171 = dma.hbm_to_vmem [thread:$0]  %s164, 512, %s166, %s154, 64, 64, 4
        $region28: #{tpu_custom_call.1} parent=23 // pred_fallthru
          _
      $region24: #{tpu_custom_call.1} parent=5 // pred_fallthru
        _
      %p172 = scmp.le.s32.totalorder 1, %s15
      %p173 = scmp.lt.s32.totalorder %s15, 3
      %p174 = pnand %p172, %p173
      %p175 = pneg %p174
      // Predicated region
      $region29: #{tpu_custom_call.1} parent=5 // pred_check
        _
      $region30: #{tpu_custom_call.1} parent=5 // pred_check_branch
        %177 = sbr.rel (%p174) target = $region32
      $region31: #{tpu_custom_call.1} parent=5 // pred_region
        %s178 = ssub.s32 %s15, 1
        %s179 = sand.u32 %s63, 1
        %s180 = scalar_lea.sflag [#allocation3], %s179
        %s181 = sand.u32 %s63, 1
        %s182 = smul.addr %s181, 32
        %s183 = scalar_lea.vmem [#allocation2], %s182
        // Predicated region
        $region33: #{tpu_custom_call.1} parent=31 // pred_check
          %p184 = pneg %p76
        $region34: #{tpu_custom_call.1} parent=31 // pred_check_branch
          %186 = sbr.rel (%p184) target = $region36
        $region35: #{tpu_custom_call.1} parent=31 // pred_region
          %187 = dma.done %s180, 512
        $region36: #{tpu_custom_call.1} parent=31 // pred_fallthru
          _
        %p188 = pneg %p48
        %p189 = pneg %p45
        %s190 = sand.u32 %s63, 1
        %s191 = scalar_lea.sflag [#allocation3], %s190
        %s192 = sand.u32 %s63, 1
        %s193 = smul.addr %s192, 32
        %s194 = scalar_lea.vmem [#allocation2], %s193
        %p195 = pneg %p76
        %p196 = pneg %p73
        %p197 = pneg %p97
        %p198 = pneg %p94
        %p199 = pneg %p125
        %p200 = pneg %p122
        %s201 = sand.u32 %s112, 1
        %s202 = scalar_lea.sflag [#allocation4], %s201
        %s203 = sand.u32 %s112, 1
        %s204 = smul.addr %s203, 32
        %s205 = scalar_lea.vmem [#allocation5], %s204
        %v207 = vld [vmem:[%s0] sm:$0xf]
        %v208 = vld [vmem:[%s0 + $0x4] sm:$0xf]
        %v209 = vld [vmem:[%s0 + $0x8] sm:$0xf]
        %v210 = vld [vmem:[%s0 + $0xc] sm:$0xf]
        %v211 = vld [vmem:[%s183] sm:$0xf]
        %v212 = vld [vmem:[%s183 + $0x4] sm:$0xf]
        %v213 = vld [vmem:[%s183 + $0x8] sm:$0xf]
        %v214 = vld [vmem:[%s183 + $0xc] sm:$0xf]
        %v215 = vld [vmem:[%s183 + $0x10] sm:$0xf]
        %v216 = vld [vmem:[%s183 + $0x14] sm:$0xf]
        %v217 = vld [vmem:[%s183 + $0x18] sm:$0xf]
        %v218 = vld [vmem:[%s183 + $0x1c] sm:$0xf]
        %v219 = vld [vmem:[%s2] sm:$0xff]
        %v220 = vld [vmem:[%s2 + $0x8] sm:$0xff]
        %v221 = vld [vmem:[%s2 + $0x10] sm:$0xff]
        %v222 = vld [vmem:[%s2 + $0x18] sm:$0xff]
        %224 = vset.pattern.permute.xlu0 0
        %225 = vperm.xlu0 %224, %v219
        %v226 = vpop.permute.xlu0 %225
        %229 = vset.pattern.permute.xlu0 0
        %230 = vperm.xlu0 %229, %v220
        %v231 = vpop.permute.xlu0 %230
        %234 = vset.pattern.permute.xlu0 0
        %235 = vperm.xlu0 %234, %v221
        %v236 = vpop.permute.xlu0 %235
        %239 = vset.pattern.permute.xlu0 0
        %240 = vperm.xlu0 %239, %v222
        %v241 = vpop.permute.xlu0 %240
        %v247 = vunpack.c.l.b16 %v207
        %v248 = vunpack.c.l.b16 %v208
        %v249 = vunpack.c.l.b16 %v209
        %v250 = vunpack.c.l.b16 %v210
        %v251 = vpack.c.b16 %v248, %v247
        %v252 = vpack.c.b16 %v250, %v249
        %v261 = vunpack.c.l.b16 %v211
        %v262 = vunpack.c.l.b16 %v212
        %v263 = vunpack.c.l.b16 %v213
        %v264 = vunpack.c.l.b16 %v214
        %v265 = vunpack.c.l.b16 %v215
        %v266 = vunpack.c.l.b16 %v216
        %v267 = vunpack.c.l.b16 %v217
        %v268 = vunpack.c.l.b16 %v218
        %v269 = vpack.c.b16 %v262, %v261
        %v270 = vpack.c.b16 %v264, %v263
        %v271 = vpack.c.b16 %v266, %v265
        %v272 = vpack.c.b16 %v268, %v267
        %vm277 = vcmask 523264
        %v279 = vsel %vm277, %v251, 0
        %v282 = vsel %vm277, %v252, 0
        %284 = vmatprep.subr.bf16.mxu0 0
        %285 = vmatpush1.bf16.msra.mxu0 %v269
        %286 = vmatprep.subr.bf16.mxu0 0
        %287 = vmatpush1.bf16.msra.mxu0 %v270
        %288 = vmatprep.subr.bf16.mxu0 0
        %289 = vmatpush1.bf16.msra.mxu0 %v271
        %290 = vmatprep.subr.bf16.mxu0 0
        %291 = vmatpush1.bf16.msra.mxu0 %v272
        %292 = vmatprep.subr.bf16.mxu0 0
        %293 = vmatpush1.bf16.msra.mxu0 0
        %294 = vmatprep.subr.bf16.mxu0 0
        %295 = vmatpush1.bf16.msra.mxu0 0
        %296 = vmatprep.subr.bf16.mxu0 0
        %297 = vmatpush1.bf16.msra.mxu0 0
        %298 = vmatprep.subr.bf16.mxu0 0
        %299 = vmatpush1.bf16.msra.mxu0 0
        %300 = vmatprep.subr.bf16.mxu0 0
        %301 = vmatpush1.bf16.msra.mxu0 0
        %302 = vmatprep.subr.bf16.mxu0 0
        %303 = vmatpush1.bf16.msra.mxu0 0
        %304 = vmatprep.subr.bf16.mxu0 0
        %305 = vmatpush1.bf16.msra.mxu0 0
        %306 = vmatprep.subr.bf16.mxu0 0
        %307 = vmatpush1.bf16.msra.mxu0 0
        %308 = vmatprep.subr.bf16.mxu0 0
        %309 = vmatpush1.bf16.msra.mxu0 0
        %310 = vmatprep.subr.bf16.mxu0 0
        %311 = vmatpush1.bf16.msra.mxu0 0
        %312 = vmatprep.subr.bf16.mxu0 0
        %313 = vmatpush1.bf16.msra.mxu0 0
        %314 = vmatprep.subr.bf16.mxu0 0
        %315 = vmatpush1.bf16.msra.mxu0 0
        %316 = vmatprep.mubr.bf16.mxu0 0
        %317 = vmatmul.mubr.bf16.gmra.mrb[0].mxu0 %v279
        %v318 = vpop.f32.mrb[0].mxu0
        %v319 = vadd.f32 %v226, %v318
        %v320 = vpop.f32.mrb[0].mxu0
        %v321 = vpop.f32.mrb[0].mxu0
        %v322 = vadd.f32 %v231, %v321
        %v323 = vpop.f32.mrb[0].mxu0
        %324 = vmatprep.mubr.bf16.mxu0 0
        %325 = vmatmul.mubr.bf16.gmra.mrb[0].mxu0 %v282
        %v326 = vpop.f32.mrb[0].mxu0
        %v327 = vadd.f32 %v236, %v326
        %v328 = vpop.f32.mrb[0].mxu0
        %v329 = vpop.f32.mrb[0].mxu0
        %v330 = vadd.f32 %v241, %v329
        %v331 = vpop.f32.mrb[0].mxu0
        %332 = vdwg.mxu0
        %333 = vst [vmem:[%s205] sm:$0xff] %v319
        %334 = vst [vmem:[%s205 + $0x8] sm:$0xff] %v322
        %335 = vst [vmem:[%s205 + $0x10] sm:$0xff] %v327
        %336 = vst [vmem:[%s205 + $0x18] sm:$0xff] %v330
        %s337 = sand.u32 %s112, 1
        %s338 = scalar_lea.sflag [#allocation4], %s337
        %s339 = sand.u32 %s112, 1
        %s340 = smul.addr %s339, 32
        %s341 = scalar_lea.vmem [#allocation5], %s340
        // Predicated region
        $region37: #{tpu_custom_call.1} parent=31 // pred_check
          %p342 = pneg %p122
        $region38: #{tpu_custom_call.1} parent=31 // pred_check_branch
          %344 = sbr.rel (%p342) target = $region40
        $region39: #{tpu_custom_call.1} parent=31 // pred_region
          %s346 = ssub.s32 512, 512
          %347 = vsyncadd %s338, %s346
          %s348 = smul.addr %s24, 4
          %s349 = sadd.s32 %s25, %s348
          %s350 = smul.addr %s349, 128
          %s351 = scalar_lea.hbm %s3, %s350
          %s352 = sshll.u32 %s341, 4
          %s353 = int_to_ptr.vmem [resolvable:$true] %s352
          %358 = dma.vmem_to_hbm [thread:$0]  %s353, 512, %s351, %s338, 128, 128, 8
        $region40: #{tpu_custom_call.1} parent=31 // pred_fallthru
          _
      $region32: #{tpu_custom_call.1} parent=5 // pred_fallthru
        _
      %p359 = scmp.le.s32.totalorder 2, %s15
      // Predicated region
      $region41: #{tpu_custom_call.1} parent=5 // pred_check
        %p360 = pneg %p359
      $region42: #{tpu_custom_call.1} parent=5 // pred_check_branch
        %362 = sbr.rel (%p360) target = $region44
      $region43: #{tpu_custom_call.1} parent=5 // pred_region
        %s363 = ssub.s32 %s15, 2
        // Predicated region
        $region45: #{tpu_custom_call.1} parent=43 // pred_check
          %p364 = pneg %p128
        $region46: #{tpu_custom_call.1} parent=43 // pred_check_branch
          %366 = sbr.rel (%p364) target = $region48
        $region47: #{tpu_custom_call.1} parent=43 // pred_region
          %s367 = sand.u32 %s113, 1
          %s368 = scalar_lea.sflag [#allocation4], %s367
          %s369 = sand.u32 %s113, 1
          %s370 = smul.addr %s369, 32
          %s371 = scalar_lea.vmem [#allocation5], %s370
          %372 = dma.done %s368, 512
        $region48: #{tpu_custom_call.1} parent=43 // pred_fallthru
          _
      $region44: #{tpu_custom_call.1} parent=5 // pred_fallthru
        _
    $region6: #{tpu_custom_call.1} parent=1 // loop_footer
      %s19 = sadd.s32 1, %s15
    $region7: #{tpu_custom_call.1} parent=1 // loop_footer_branch
      %14 = sbr.rel target = $region3
    $region8: #{tpu_custom_call.1} parent=1 // loop_exit
      _
    %373 = vsyncpa [#allocation3], 1
    %s374 = scalar_lea.sflag [#allocation3], 1
    %375 = vsyncpa %s374, 1
    %376 = vsyncpa [#allocation4], 1
    %s377 = scalar_lea.sflag [#allocation4], 1
    %378 = vsyncpa %s377, 1

</llo_original>
